<compile_context>
chip_gen: v5e
topology: v5e:2x2
jax: 0.10.0
libtpu: 0.0.40
codegen_flags: <defaults>
</compile_context>

<pallas_src>
import functools
import math

import jax
import jax.numpy as jnp
from jax.experimental import pallas as pl
from jax.experimental.pallas import tpu as pltpu

PARAM_ORDER = ("wqkv", "bqkv", "wo", "bo", "g1", "b1",
               "wi", "bi", "wo2", "bo2", "g2", "b2")
MATMUL_WEIGHTS = ("wqkv", "wo", "wi", "wo2")   # cast to bf16 for the MXU


# ---------------------------- in-kernel helpers ----------------------------

def _layer_norm(x, g, b, eps=1e-12):
    # BertLayerNorm: biased variance, eps inside the sqrt.  rsqrt -> EUP slot.
    u = jnp.mean(x, axis=-1, keepdims=True)
    d = x - u
    s = jnp.mean(d * d, axis=-1, keepdims=True)
    return g * (d * jax.lax.rsqrt(s + eps)) + b


def _gelu(x):
    # ACT2FN["gelu"]: exact erf-based GELU (erf runs on the EUP).
    return x * 0.5 * (1.0 + jax.lax.erf(x * (1.0 / math.sqrt(2.0))))


# ---------------------- kernel 1: fused QKV projection ----------------------

def _qkv_proj_kernel(x_ref, wqkv_ref, bqkv_ref, q_ref, k_ref, v_ref, *, scale):
    x = x_ref[0]                                     # [ts, H] f32
    H = x.shape[1]
    qkv = (jnp.dot(x.astype(jnp.bfloat16), wqkv_ref[...],
                   preferred_element_type=jnp.float32) + bqkv_ref[...])
    # Fold 1/sqrt(hd) into Q once (removes the per-head [tq,S] VPU multiply).
    q_ref[0] = (qkv[:, :H] * scale).astype(jnp.bfloat16)
    k_ref[0] = qkv[:, H:2 * H].astype(jnp.bfloat16)
    v_ref[0] = qkv[:, 2 * H:].astype(jnp.bfloat16)


# ---------------- kernel 2: attention + LN + GELU FFN + LN -----------------

def _attn_ffn_kernel(x_ref, m_ref, q_ref, k_ref, v_ref,
                     wo_ref, bo_ref, g1_ref, b1_ref,
                     wi_ref, bi_ref, wo2_ref, bo2_ref, g2_ref, b2_ref,
                     out_ref, probs_ref, *, num_heads, i_slab):
    x_t = x_ref[0]                       # [tq, H] f32   (residual input)
    mask = m_ref[0]                      # [1, S]  f32   additive key bias
    q_t = q_ref[0]                       # [tq, H] bf16  (pre-scaled by 1/sqrt(hd))
    k_all = k_ref[0]                     # [S, H]  bf16
    v_all = v_ref[0]                     # [S, H]  bf16
    tq, H = x_t.shape
    S = k_all.shape[0]
    hd = H // num_heads

    # Hoist the mask broadcast out of the head loop (no CSE of broadcast_in_dim).
    mask_b = jnp.broadcast_to(mask, (tq, S))

    # Per-head scaled-dot-product attention (static unroll); contexts collected
    # as values and concatenated once -> lane-dense [tq, H], no scratch buffer.
    ctx_heads = []
    for h in range(num_heads):
        lo = h * hd
        qh = q_t[:, lo:lo + hd]
        kh = k_all[:, lo:lo + hd]
        vh = v_all[:, lo:lo + hd]
        scores = jax.lax.dot_general(
            qh, kh, dimension_numbers=(((1,), (1,)), ((), ())),
            preferred_element_type=jnp.float32) + mask_b          # [tq, S]
        m = jnp.max(scores, axis=-1, keepdims=True)
        e = jnp.exp(scores - m)
        denom = jnp.sum(e, axis=-1, keepdims=True)
        probs = e * pl.reciprocal(denom, approx=True)   # EUP, not a VPU divide
        pb = probs.astype(jnp.bfloat16)                 # bf16 for store + MXU
        probs_ref[0, h] = pb
        ctx_heads.append(jnp.dot(pb, vh, preferred_element_type=jnp.float32))
    ctx = jnp.concatenate(ctx_heads, axis=-1)            # [tq, H] f32
    # TODO(synk): hd=64 head slices are not 128-lane aligned for odd heads; a
    # head-major weight reorder could remove the resulting relayouts.

    # Self-output dense + residual + LayerNorm.
    attn = (jnp.dot(ctx.astype(jnp.bfloat16), wo_ref[...],
                    preferred_element_type=jnp.float32) + bo_ref[...])
    h1 = _layer_norm(attn + x_t, g1_ref[...], b1_ref[...])
    h1_bf = h1.astype(jnp.bfloat16)

    # GELU FFN, sliced along I: GELU(erf, EUP) on slab s overlaps the MXU on
    # slab s+1, and the second FFN matmul is accumulated per slab so the full
    # [tq, I] intermediate never materializes.
    I = wi_ref.shape[1]
    acc = jnp.zeros((tq, H), jnp.float32)
    for s in range(I // i_slab):
        lo = s * i_slab
        part = (jnp.dot(h1_bf, wi_ref[:, lo:lo + i_slab],
                        preferred_element_type=jnp.float32)
                + bi_ref[:, lo:lo + i_slab])
        part = _gelu(part)
        acc = acc + jnp.dot(part.astype(jnp.bfloat16),
                            wo2_ref[lo:lo + i_slab, :],
                            preferred_element_type=jnp.float32)
    out = acc + bo2_ref[...]
    out_ref[0] = _layer_norm(out + h1, g2_ref[...], b2_ref[...])


# ------------------------------ tile selection ------------------------------

def _device_kind():
    try:
        return jax.devices()[0].device_kind.lower()
    except Exception:
        return ""


def _vmem_capacity_bytes():
    try:
        return int(pltpu.get_tpu_info().vmem_capacity_bytes)
    except Exception:
        return 64 * 1024 * 1024          # conservative default (v7x physical)


def _pick_q_tile(S):
    kind = _device_kind()
    if ("v5 lite" in kind) or ("v5e" in kind) or ("v5lite" in kind):
        cands = (128,)          # v5e MXU is 128-wide; larger tiles just burn VMEM
    else:
        cands = (256, 128)      # v6e/v7x MXUs are 256-wide; never pick S=512
    for t in cands:
        if S % t == 0:
            return t
    return S                    # small / odd sequence lengths: single tile


def _pick_i_slab(I):
    for t in (1024, 512):
        if I % t == 0:
            return t
    return I


def _const_spec(arr, single_buffer):
    nd = arr.ndim
    idx = lambda b, i, _nd=nd: (0,) * _nd
    if single_buffer:
        # Constant index_map -> second pipeline buffer is pure VMEM waste.
        return pl.BlockSpec(arr.shape, idx, pipeline_mode=pl.Buffered(1))
    return pl.BlockSpec(arr.shape, idx)


# --------------------------------- wrapper ---------------------------------

def _forward(x, mask3, weights, num_heads, q_tile, single_buffer_weights):
    B, S, H = x.shape
    (wqkv, bqkv, wo, bo, g1, b1, wi, bi, wo2, bo2, g2, b2) = weights
    I = wi.shape[1]
    hd = H // num_heads
    n_q = S // q_tile
    i_slab = _pick_i_slab(I)
    wbuf = 1 if single_buffer_weights else 2
    vmem_cap = _vmem_capacity_bytes()
    vmem_ceiling = max(vmem_cap - (8 << 20), 24 << 20)   # leave compiler scratch headroom

    # ---------------- kernel 1: QKV projection (once per token) ----------------
    proj_weight_bytes = int(wqkv.size) * 2 + int(bqkv.size) * 4
    proj_demand = (proj_weight_bytes * wbuf
                   + 2 * q_tile * H * 4            # x block (double-buffered)
                   + 2 * 3 * q_tile * H * 2        # q/k/v output blocks
                   + q_tile * 3 * H * 4)           # f32 qkv transient
    proj_vmem = int(min(max(proj_demand + (6 << 20), 16 << 20), vmem_ceiling))
    proj_cost = pl.CostEstimate(
        flops=int(2 * B * S * H * 3 * H), transcendentals=0,
        bytes_accessed=int(B * S * H * 4 + proj_weight_bytes + 3 * B * S * H * 2))

    q, k, v = pl.pallas_call(
        functools.partial(_qkv_proj_kernel, scale=1.0 / math.sqrt(hd)),
        out_shape=tuple(jax.ShapeDtypeStruct((B, S, H), jnp.bfloat16)
                        for _ in range(3)),
        grid_spec=pltpu.PrefetchScalarGridSpec(
            num_scalar_prefetch=0,
            grid=(B, n_q),
            in_specs=[pl.BlockSpec((1, q_tile, H), lambda b, si: (b, si, 0)),
                      _const_spec(wqkv, single_buffer_weights),
                      _const_spec(bqkv, single_buffer_weights)],
            out_specs=tuple(pl.BlockSpec((1, q_tile, H), lambda b, si: (b, si, 0))
                            for _ in range(3))),
        compiler_params=pltpu.CompilerParams(
            dimension_semantics=("parallel", "parallel"),
            vmem_limit_bytes=proj_vmem),
        cost_estimate=proj_cost,
    )(x, wqkv, bqkv)

    # --------------- kernel 2: attention + LN + GELU FFN + LN ----------------
    main_weights = (wo, bo, g1, b1, wi, bi, wo2, bo2, g2, b2)
    main_weight_bytes = sum(int(w.size) * w.dtype.itemsize for w in main_weights)
    demand = (main_weight_bytes * wbuf
              # double-buffered input blocks: x(f32) + q(bf16) + k,v(bf16) + mask
              + 2 * (q_tile * H * 4 + q_tile * H * 2 + 2 * S * H * 2 + S * 4)
              # double-buffered output blocks: out(f32) + probs(bf16)
              + 2 * (q_tile * H * 4 + num_heads * q_tile * S * 2)
              # f32 transients: scores, ctx/attn/h1/acc, FFN slab
              + 2 * q_tile * S * 4 + 4 * q_tile * H * 4 + 2 * q_tile * i_slab * 4)
    vmem_limit = int(min(max(demand + (8 << 20), 16 << 20), vmem_ceiling))

    flops = int(B * (4 * S * S * H        # QK^T + probs@V over all heads
                     + 2 * S * H * H      # self-output dense
                     + 4 * S * H * I))    # intermediate + output dense
    transcendentals = int(B * (num_heads * S * S + S * I))      # exp + erf
    bytes_accessed = int(B * S * H * 4 + B * S * 4 + 3 * B * S * H * 2
                         + main_weight_bytes
                         + B * S * H * 4 + B * num_heads * S * S * 2)

    kernel = functools.partial(_attn_ffn_kernel,
                               num_heads=num_heads, i_slab=i_slab)
    in_specs = ([pl.BlockSpec((1, q_tile, H), lambda b, qi: (b, qi, 0)),   # x (residual)
                 pl.BlockSpec((1, 1, S), lambda b, qi: (b, 0, 0)),         # key mask
                 pl.BlockSpec((1, q_tile, H), lambda b, qi: (b, qi, 0)),   # Q tile
                 pl.BlockSpec((1, S, H), lambda b, qi: (b, 0, 0)),         # K full seq
                 pl.BlockSpec((1, S, H), lambda b, qi: (b, 0, 0))]         # V full seq
                + [_const_spec(w, single_buffer_weights) for w in main_weights])
    out_specs = (pl.BlockSpec((1, q_tile, H), lambda b, qi: (b, qi, 0)),
                 pl.BlockSpec((1, num_heads, q_tile, S),
                              lambda b, qi: (b, 0, qi, 0)))
    out_shape = (jax.ShapeDtypeStruct((B, S, H), jnp.float32),
                 jax.ShapeDtypeStruct((B, num_heads, S, S), jnp.bfloat16))

    return pl.pallas_call(
        kernel,
        out_shape=out_shape,
        grid_spec=pltpu.PrefetchScalarGridSpec(
            num_scalar_prefetch=0, grid=(B, n_q),
            in_specs=in_specs, out_specs=out_specs),
        compiler_params=pltpu.CompilerParams(
            dimension_semantics=("parallel", "parallel"),
            vmem_limit_bytes=vmem_limit),
        cost_estimate=pl.CostEstimate(flops=flops,
                                      transcendentals=transcendentals,
                                      bytes_accessed=bytes_accessed),
    )(x, mask3, q, k, v, *main_weights)


def bert_image_layer_pallas(x, mask, params, num_heads):
    """BertImageLayer.forward.
    x: [B,S,H] f32, mask: [B,S] additive key bias.
    Returns (layer_output [B,S,H] f32, attention_probs [B,nh,S,S] bf16)."""
    B, S, H = x.shape
    assert H % num_heads == 0, (H, num_heads)
    x = x.astype(jnp.float32)
    mask3 = mask.reshape(B, 1, S).astype(jnp.float32)

    weights = []
    for name in PARAM_ORDER:
        w = params[name]
        w = w.astype(jnp.bfloat16) if name in MATMUL_WEIGHTS else w.astype(jnp.float32)
        weights.append(w)
    weights = tuple(weights)

    q_tile = _pick_q_tile(S)

    # Single-buffered constant-weight BlockSpecs are the biggest VMEM recovery;
    # fall back to default (double) buffering if this JAX build rejects
    # pipeline_mode=pl.Buffered(1).
    try:
        out, probs = _forward(x, mask3, weights, num_heads, q_tile,
                              single_buffer_weights=True)
        jax.block_until_ready(out)
        jax.block_until_ready(probs)
        return out, probs
    except Exception:
        return _forward(x, mask3, weights, num_heads, q_tile,
                        single_buffer_weights=False)


# --------------------------- pure-JAX reference ---------------------------

def bert_image_layer_ref(x, mask, p, num_heads):
    B, S, H = x.shape
    hd = H // num_heads
    qkv = x @ p["wqkv"] + p["bqkv"][0]
    q, k, v = qkv[..., :H], qkv[..., H:2 * H], qkv[..., 2 * H:]

    def split(z):
        return z.reshape(B, S, num_heads, hd).transpose(0, 2, 1, 3)

    q, k, v = split(q), split(k), split(v)
    scores = jnp.einsum("bhqd,bhkd->bhqk", q, k) / math.sqrt(hd)
    scores = scores + mask[:, None, None, :]
    probs = jax.nn.softmax(scores, axis=-1)
    ctx = jnp.einsum("bhqk,bhkd->bhqd", probs, v)
    ctx = ctx.transpose(0, 2, 1, 3).reshape(B, S, H)
    attn = ctx @ p["wo"] + p["bo"][0]
    h1 = _layer_norm(attn + x, p["g1"][0], p["b1"][0])
    inter = _gelu(h1 @ p["wi"] + p["bi"][0])
    out = inter @ p["wo2"] + p["bo2"][0]
    return _layer_norm(out + h1, p["g2"][0], p["b2"][0]), probs


# -------------------------- deterministic init --------------------------

def init_bert_image_layer_params(key, hidden, intermediate):
    ks = jax.random.split(key, 4)
    std = 0.02
    w = lambda k, shp: jax.random.normal(k, shp, jnp.float32) * std
    zeros = lambda n: jnp.zeros((1, n), jnp.float32)
    ones = lambda n: jnp.ones((1, n), jnp.float32)
    return {
        "wqkv": w(ks[0], (hidden, 3 * hidden)), "bqkv": zeros(3 * hidden),
        "wo": w(ks[1], (hidden, hidden)), "bo": zeros(hidden),
        "g1": ones(hidden), "b1": zeros(hidden),
        "wi": w(ks[2], (hidden, intermediate)), "bi": zeros(intermediate),
        "wo2": w(ks[3], (intermediate, hidden)), "bo2": zeros(hidden),
        "g2": ones(hidden), "b2": zeros(hidden),
    }


# ---------------------------------- main ----------------------------------

if __name__ == "__main__":
    # Small harness shapes (v_hidden_size=32, 4 heads, 8 regions).  NOTE: these
    # are below the (8,128) vreg tile, so they validate correctness only; perf
    # should be measured at real shapes (S=256-512, H=768/1024, I=4H).
    B, S, H, I, NH = 2, 8, 32, 64, 4

    root = jax.random.PRNGKey(0)
    kx, km, kp = jax.random.split(root, 3)
    x = jax.random.normal(kx, (B, S, H), jnp.float32)
    keep = jax.random.uniform(km, (B, S)) > 0.2
    mask = jnp.where(keep, 0.0, -10000.0).astype(jnp.float32)   # additive key mask
    params = init_bert_image_layer_params(kp, H, I)

    out, probs = bert_image_layer_pallas(x, mask, params, NH)
    out = jax.block_until_ready(out)
    probs = jax.block_until_ready(probs)

    ref_out, ref_probs = bert_image_layer_ref(x, mask, params, NH)
    err_out = float(jnp.max(jnp.abs(out - ref_out)))
    err_probs = float(jnp.max(jnp.abs(probs.astype(jnp.float32) - ref_probs)))

    assert out.shape == (B, S, H)
    assert probs.shape == (B, NH, S, S)
    # bf16 MXU operands / bf16 probs output with f32 accumulation.
    assert err_out < 2e-2 and err_probs < 2e-2, (err_out, err_probs)

    print("KERNEL_OK")
</pallas_src>

<mosaic_0001>
module attributes {stable_mosaic.version = 11 : i64} {
  func.func @_qkv_proj_kernel(%arg0: i32, %arg1: i32, %arg2: memref<1x8x32xf32, #tpu.memory_space<vmem>>, %arg3: memref<32x96xbf16, #tpu.memory_space<vmem>>, %arg4: memref<1x96xf32, #tpu.memory_space<vmem>>, %arg5: memref<1x8x32xbf16, #tpu.memory_space<vmem>>, %arg6: memref<1x8x32xbf16, #tpu.memory_space<vmem>>, %arg7: memref<1x8x32xbf16, #tpu.memory_space<vmem>>) attributes {dimension_semantics = [#tpu.dimension_semantics<parallel>, #tpu.dimension_semantics<parallel>], iteration_bounds = array<i64: 2, 1>, scalar_prefetch = 0 : i64, scratch_operands = 0 : i64, tpu.core_type = #tpu.core_type<tc>, window_params = [{transform_indices = @transform_0, window_bounds = array<i64: 1, 8, 32>}, {pipeline_mode = #tpu.pipeline_mode<synchronous>, transform_indices = @transform_1, window_bounds = array<i64: 32, 96>}, {pipeline_mode = #tpu.pipeline_mode<synchronous>, transform_indices = @transform_2, window_bounds = array<i64: 1, 96>}, {transform_indices = @transform_3, window_bounds = array<i64: 1, 8, 32>}, {transform_indices = @transform_4, window_bounds = array<i64: 1, 8, 32>}, {transform_indices = @transform_5, window_bounds = array<i64: 1, 8, 32>}]} {
    %c0 = arith.constant 0 : index
    %c0_0 = arith.constant 0 : index
    %c0_1 = arith.constant 0 : index
    %0 = vector.load %arg2[%c0, %c0_0, %c0_1] : memref<1x8x32xf32, #tpu.memory_space<vmem>>, vector<1x8x32xf32>
    %1 = vector.shape_cast %0 : vector<1x8x32xf32> to vector<8x32xf32>
    %2 = arith.truncf %1 : vector<8x32xf32> to vector<8x32xbf16>
    %c0_2 = arith.constant 0 : index
    %c0_3 = arith.constant 0 : index
    %3 = vector.load %arg3[%c0_2, %c0_3] : memref<32x96xbf16, #tpu.memory_space<vmem>>, vector<32x96xbf16>
    %cst = arith.constant dense<0.000000e+00> : vector<8x96xf32>
    %4 = tpu.matmul %2, %3, %cst {dimension_numbers = #tpu.dot_dimension_numbers<[1], [0], [0], [1], [0, 0, 1, 1], [], []>} : vector<8x32xbf16>, vector<32x96xbf16>, vector<8x96xf32> -> vector<8x96xf32>
    %c0_4 = arith.constant 0 : index
    %c0_5 = arith.constant 0 : index
    %5 = vector.load %arg4[%c0_4, %c0_5] : memref<1x96xf32, #tpu.memory_space<vmem>>, vector<1x96xf32>
    %6 = vector.broadcast %5 : vector<1x96xf32> to vector<8x96xf32>
    %7 = arith.addf %4, %6 : vector<8x96xf32>
    %8 = vector.extract_strided_slice %7 {offsets = [0, 0], sizes = [8, 32], strides = [1, 1]} : vector<8x96xf32> to vector<8x32xf32>
    %cst_6 = arith.constant 0.353553385 : f32
    %9 = vector.broadcast %cst_6 : f32 to vector<8x32xf32>
    %10 = arith.mulf %8, %9 : vector<8x32xf32>
    %11 = arith.truncf %10 : vector<8x32xf32> to vector<8x32xbf16>
    %c0_7 = arith.constant 0 : index
    %c0_8 = arith.constant 0 : index
    %c0_9 = arith.constant 0 : index
    %12 = vector.load %arg5[%c0_7, %c0_8, %c0_9] : memref<1x8x32xbf16, #tpu.memory_space<vmem>>, vector<1x8x32xbf16>
    %13 = vector.shape_cast %12 : vector<1x8x32xbf16> to vector<8x32xbf16>
    %14 = vector.shape_cast %11 : vector<8x32xbf16> to vector<1x8x32xbf16>
    tpu.vector_store %arg5[%c0_7, %c0_8, %c0_9], %14 {strides = array<i32>} : memref<1x8x32xbf16, #tpu.memory_space<vmem>>, vector<1x8x32xbf16>,
    %15 = vector.extract_strided_slice %7 {offsets = [0, 32], sizes = [8, 32], strides = [1, 1]} : vector<8x96xf32> to vector<8x32xf32>
    %16 = arith.truncf %15 : vector<8x32xf32> to vector<8x32xbf16>
    %c0_10 = arith.constant 0 : index
    %c0_11 = arith.constant 0 : index
    %c0_12 = arith.constant 0 : index
    %17 = vector.load %arg6[%c0_10, %c0_11, %c0_12] : memref<1x8x32xbf16, #tpu.memory_space<vmem>>, vector<1x8x32xbf16>
    %18 = vector.shape_cast %17 : vector<1x8x32xbf16> to vector<8x32xbf16>
    %19 = vector.shape_cast %16 : vector<8x32xbf16> to vector<1x8x32xbf16>
    tpu.vector_store %arg6[%c0_10, %c0_11, %c0_12], %19 {strides = array<i32>} : memref<1x8x32xbf16, #tpu.memory_space<vmem>>, vector<1x8x32xbf16>,
    %20 = vector.extract_strided_slice %7 {offsets = [0, 64], sizes = [8, 32], strides = [1, 1]} : vector<8x96xf32> to vector<8x32xf32>
    %21 = arith.truncf %20 : vector<8x32xf32> to vector<8x32xbf16>
    %c0_13 = arith.constant 0 : index
    %c0_14 = arith.constant 0 : index
    %c0_15 = arith.constant 0 : index
    %22 = vector.load %arg7[%c0_13, %c0_14, %c0_15] : memref<1x8x32xbf16, #tpu.memory_space<vmem>>, vector<1x8x32xbf16>
    %23 = vector.shape_cast %22 : vector<1x8x32xbf16> to vector<8x32xbf16>
    %24 = vector.shape_cast %21 : vector<8x32xbf16> to vector<1x8x32xbf16>
    tpu.vector_store %arg7[%c0_13, %c0_14, %c0_15], %24 {strides = array<i32>} : memref<1x8x32xbf16, #tpu.memory_space<vmem>>, vector<1x8x32xbf16>,
    return
  }
  func.func @transform_0(%arg0: i32, %arg1: i32) -> (i32, i32, i32) {
    %c0_i32 = arith.constant 0 : i32
    %c0_i32_0 = arith.constant 0 : i32
    return %arg0, %arg1, %c0_i32 : i32, i32, i32
  }
  func.func @transform_1(%arg0: i32, %arg1: i32) -> (i32, i32) {
    %c0_i32 = arith.constant 0 : i32
    %c0_i32_0 = arith.constant 0 : i32
    %c0_i32_1 = arith.constant 0 : i32
    return %c0_i32, %c0_i32_0 : i32, i32
  }
  func.func @transform_2(%arg0: i32, %arg1: i32) -> (i32, i32) {
    %c0_i32 = arith.constant 0 : i32
    %c0_i32_0 = arith.constant 0 : i32
    %c0_i32_1 = arith.constant 0 : i32
    return %c0_i32, %c0_i32_0 : i32, i32
  }
  func.func @transform_3(%arg0: i32, %arg1: i32) -> (i32, i32, i32) {
    %c0_i32 = arith.constant 0 : i32
    %c0_i32_0 = arith.constant 0 : i32
    return %arg0, %arg1, %c0_i32 : i32, i32, i32
  }
  func.func @transform_4(%arg0: i32, %arg1: i32) -> (i32, i32, i32) {
    %c0_i32 = arith.constant 0 : i32
    %c0_i32_0 = arith.constant 0 : i32
    return %arg0, %arg1, %c0_i32 : i32, i32, i32
  }
  func.func @transform_5(%arg0: i32, %arg1: i32) -> (i32, i32, i32) {
    %c0_i32 = arith.constant 0 : i32
    %c0_i32_0 = arith.constant 0 : i32
    return %arg0, %arg1, %c0_i32 : i32, i32, i32
  }
}

module attributes {stable_mosaic.version = 11 : i64} {
  func.func @_qkv_proj_kernel(%arg0: i32, %arg1: i32, %arg2: memref<1x8x32xf32, #tpu.memory_space<vmem>>, %arg3: memref<32x96xbf16, #tpu.memory_space<vmem>>, %arg4: memref<1x96xf32, #tpu.memory_space<vmem>>, %arg5: memref<1x8x32xbf16, #tpu.memory_space<vmem>>, %arg6: memref<1x8x32xbf16, #tpu.memory_space<vmem>>, %arg7: memref<1x8x32xbf16, #tpu.memory_space<vmem>>) attributes {dimension_semantics = [#tpu.dimension_semantics<parallel>, #tpu.dimension_semantics<parallel>], iteration_bounds = array<i64: 2, 1>, scalar_prefetch = 0 : i64, scratch_operands = 0 : i64, tpu.core_type = #tpu.core_type<tc>, window_params = [{transform_indices = @transform_0, window_bounds = array<i64: 1, 8, 32>}, {pipeline_mode = #tpu.pipeline_mode<synchronous>, transform_indices = @transform_1, window_bounds = array<i64: 32, 96>}, {pipeline_mode = #tpu.pipeline_mode<synchronous>, transform_indices = @transform_2, window_bounds = array<i64: 1, 96>}, {transform_indices = @transform_3, window_bounds = array<i64: 1, 8, 32>}, {transform_indices = @transform_4, window_bounds = array<i64: 1, 8, 32>}, {transform_indices = @transform_5, window_bounds = array<i64: 1, 8, 32>}]} {
    %c0 = arith.constant 0 : index
    %c0_0 = arith.constant 0 : index
    %c0_1 = arith.constant 0 : index
    %0 = vector.load %arg2[%c0, %c0_0, %c0_1] : memref<1x8x32xf32, #tpu.memory_space<vmem>>, vector<1x8x32xf32>
    %1 = vector.shape_cast %0 : vector<1x8x32xf32> to vector<8x32xf32>
    %2 = arith.truncf %1 : vector<8x32xf32> to vector<8x32xbf16>
    %c0_2 = arith.constant 0 : index
    %c0_3 = arith.constant 0 : index
    %3 = vector.load %arg3[%c0_2, %c0_3] : memref<32x96xbf16, #tpu.memory_space<vmem>>, vector<32x96xbf16>
    %cst = arith.constant dense<0.000000e+00> : vector<8x96xf32>
    %4 = tpu.matmul %2, %3, %cst {dimension_numbers = #tpu.dot_dimension_numbers<[1], [0], [0], [1], [0, 0, 1, 1], [], []>} : vector<8x32xbf16>, vector<32x96xbf16>, vector<8x96xf32> -> vector<8x96xf32>
    %c0_4 = arith.constant 0 : index
    %c0_5 = arith.constant 0 : index
    %5 = vector.load %arg4[%c0_4, %c0_5] : memref<1x96xf32, #tpu.memory_space<vmem>>, vector<1x96xf32>
    %6 = vector.broadcast %5 : vector<1x96xf32> to vector<8x96xf32>
    %7 = arith.addf %4, %6 : vector<8x96xf32>
    %8 = vector.extract_strided_slice %7 {offsets = [0, 0], sizes = [8, 32], strides = [1, 1]} : vector<8x96xf32> to vector<8x32xf32>
    %cst_6 = arith.constant 0.353553385 : f32
    %9 = vector.broadcast %cst_6 : f32 to vector<8x32xf32>
    %10 = arith.mulf %8, %9 : vector<8x32xf32>
    %11 = arith.truncf %10 : vector<8x32xf32> to vector<8x32xbf16>
    %c0_7 = arith.constant 0 : index
    %c0_8 = arith.constant 0 : index
    %c0_9 = arith.constant 0 : index
    %12 = vector.load %arg5[%c0_7, %c0_8, %c0_9] : memref<1x8x32xbf16, #tpu.memory_space<vmem>>, vector<1x8x32xbf16>
    %13 = vector.shape_cast %12 : vector<1x8x32xbf16> to vector<8x32xbf16>
    %14 = vector.shape_cast %11 : vector<8x32xbf16> to vector<1x8x32xbf16>
    tpu.vector_store %arg5[%c0_7, %c0_8, %c0_9], %14 {strides = array<i32>} : memref<1x8x32xbf16, #tpu.memory_space<vmem>>, vector<1x8x32xbf16>,
    %15 = vector.extract_strided_slice %7 {offsets = [0, 32], sizes = [8, 32], strides = [1, 1]} : vector<8x96xf32> to vector<8x32xf32>
    %16 = arith.truncf %15 : vector<8x32xf32> to vector<8x32xbf16>
    %c0_10 = arith.constant 0 : index
    %c0_11 = arith.constant 0 : index
    %c0_12 = arith.constant 0 : index
    %17 = vector.load %arg6[%c0_10, %c0_11, %c0_12] : memref<1x8x32xbf16, #tpu.memory_space<vmem>>, vector<1x8x32xbf16>
    %18 = vector.shape_cast %17 : vector<1x8x32xbf16> to vector<8x32xbf16>
    %19 = vector.shape_cast %16 : vector<8x32xbf16> to vector<1x8x32xbf16>
    tpu.vector_store %arg6[%c0_10, %c0_11, %c0_12], %19 {strides = array<i32>} : memref<1x8x32xbf16, #tpu.memory_space<vmem>>, vector<1x8x32xbf16>,
    %20 = vector.extract_strided_slice %7 {offsets = [0, 64], sizes = [8, 32], strides = [1, 1]} : vector<8x96xf32> to vector<8x32xf32>
    %21 = arith.truncf %20 : vector<8x32xf32> to vector<8x32xbf16>
    %c0_13 = arith.constant 0 : index
    %c0_14 = arith.constant 0 : index
    %c0_15 = arith.constant 0 : index
    %22 = vector.load %arg7[%c0_13, %c0_14, %c0_15] : memref<1x8x32xbf16, #tpu.memory_space<vmem>>, vector<1x8x32xbf16>
    %23 = vector.shape_cast %22 : vector<1x8x32xbf16> to vector<8x32xbf16>
    %24 = vector.shape_cast %21 : vector<8x32xbf16> to vector<1x8x32xbf16>
    tpu.vector_store %arg7[%c0_13, %c0_14, %c0_15], %24 {strides = array<i32>} : memref<1x8x32xbf16, #tpu.memory_space<vmem>>, vector<1x8x32xbf16>,
    return
  }
  func.func @transform_0(%arg0: i32, %arg1: i32) -> (i32, i32, i32) {
    %c0_i32 = arith.constant 0 : i32
    %c0_i32_0 = arith.constant 0 : i32
    return %arg0, %arg1, %c0_i32 : i32, i32, i32
  }
  func.func @transform_1(%arg0: i32, %arg1: i32) -> (i32, i32) {
    %c0_i32 = arith.constant 0 : i32
    %c0_i32_0 = arith.constant 0 : i32
    %c0_i32_1 = arith.constant 0 : i32
    return %c0_i32, %c0_i32_0 : i32, i32
  }
  func.func @transform_2(%arg0: i32, %arg1: i32) -> (i32, i32) {
    %c0_i32 = arith.constant 0 : i32
    %c0_i32_0 = arith.constant 0 : i32
    %c0_i32_1 = arith.constant 0 : i32
    return %c0_i32, %c0_i32_0 : i32, i32
  }
  func.func @transform_3(%arg0: i32, %arg1: i32) -> (i32, i32, i32) {
    %c0_i32 = arith.constant 0 : i32
    %c0_i32_0 = arith.constant 0 : i32
    return %arg0, %arg1, %c0_i32 : i32, i32, i32
  }
  func.func @transform_4(%arg0: i32, %arg1: i32) -> (i32, i32, i32) {
    %c0_i32 = arith.constant 0 : i32
    %c0_i32_0 = arith.constant 0 : i32
    return %arg0, %arg1, %c0_i32 : i32, i32, i32
  }
  func.func @transform_5(%arg0: i32, %arg1: i32) -> (i32, i32, i32) {
    %c0_i32 = arith.constant 0 : i32
    %c0_i32_0 = arith.constant 0 : i32
    return %arg0, %arg1, %c0_i32 : i32, i32, i32
  }
}

</mosaic_0001>

<llo_original>
// kernel: tpu_custom_call.1
$region0: #{tpu_custom_call.1}
  #allocation0 [shape = 'u32[]', space=smem, size = 0x4, offset = 0x4, fixed_abs, tag = 'smem constant byte address 0x4 - core index']
  #allocation1 [shape = 'u32[72,128]{1,0:T(1,128)}', space=vmem, size = 0x9000, scoped, tag = 'internal scratch']
  %s0 = inlined_call_operand.hbm [shape: f32[2,8,32], index: 0, kind: input, shape index: {}]
  %s1 = inlined_call_operand.hbm [shape: bf16[32,96], index: 1, kind: input, shape index: {}]
  %s2 = inlined_call_operand.vmem [shape: f32[1,96], index: 2, kind: input, shape index: {}]
  %s3 = inlined_call_operand.hbm [shape: bf16[2,8,32], index: 3, kind: output, shape index: {0}]
  %s4 = inlined_call_operand.hbm [shape: bf16[2,8,32], index: 4, kind: output, shape index: {1}]
  %s5 = inlined_call_operand.hbm [shape: bf16[2,8,32], index: 5, kind: output, shape index: {2}]
  %6 = xla_tuple %s3, %s4, %s5
  %s7 = sld [smem:[#allocation0]]
  $region69: #{tpu_custom_call.1} parent=0
    _
  %s9 = ssub.s32 1, %s7
  %s10 = scalar_select 0, %s9, %s7
  $region1: #{tpu_custom_call.1} parent=0
    #allocation2 [shape = 'u8[8192]{0}', space=vmem, size = 0x2000, scoped, tag = 'input window, operand 0']
    #allocation3 [shape = 's32[2]{0}', space=sflag, size = 0x8, scoped, tag = 'scoped memory for tpu_custom_call.1']
    #allocation4 [shape = 's32[2]{0}', space=sflag, size = 0x8, scoped, tag = 'scoped memory for tpu_custom_call.1']
    #allocation5 [shape = 'u8[8192]{0}', space=vmem, size = 0x2000, scoped, tag = 'input window, operand 1, single buffered']
    #allocation6 [shape = 's32[1]{0}', space=sflag, size = 0x4, scoped, tag = 'scoped memory for tpu_custom_call.1']
    #allocation7 [shape = 'u8[4096]{0}', space=vmem, size = 0x1000, scoped, tag = 'output window, operand 0']
    #allocation8 [shape = 'u8[4096]{0}', space=vmem, size = 0x1000, scoped, tag = 'output window, operand 1']
    #allocation9 [shape = 's32[2]{0}', space=sflag, size = 0x8, scoped, tag = 'scoped memory for tpu_custom_call.1']
    #allocation10 [shape = 'u8[4096]{0}', space=vmem, size = 0x1000, scoped, tag = 'output window, operand 2']
    %11 = vsyncpa [#allocation3], 0
    %s12 = scalar_lea.sflag [#allocation3], 1
    %13 = vsyncpa %s12, 0
    %14 = vsyncpa [#allocation6], 0
    %15 = vsyncpa [#allocation4], 0
    %s16 = scalar_lea.sflag [#allocation4], 1
    %17 = vsyncpa %s16, 0
    %18 = vsyncpa [#allocation9], 0
    %s19 = scalar_lea.sflag [#allocation9], 1
    %20 = vsyncpa %s19, 0
    loop: start=0, step=1, limit=4
    $region2: #{tpu_custom_call.1} parent=1 // loop_pre_header
      _
    $region3: #{tpu_custom_call.1} parent=1 // loop_header
      %s22 = sphi 0, %s26
      %p23 = scmp.ge.s32.totalorder %s22, 4
      %s29 = sphi 0, %s41
      %s30 = sphi 0, %s37
      %s31 = sphi 0, %s29
      %s32 = sphi 0, %s30
      %s33 = sphi 0, %s31
      %s34 = sphi 0, %s32
      %s46 = sphi 0, %s48
      %s49 = sphi 0, %s46
      %s50 = sphi 0, %s49
      %s66 = sphi 0, %s50
      %s70 = sphi 0, %s70
      %s72 = sphi 0, %s70
      %s73 = sphi 0, %s72
      %s87 = sphi 0, %s73
      %s91 = sphi 0, %s91
      %s93 = sphi 0, %s91
      %s94 = sphi 0, %s93
      %s108 = sphi 0, %s94
      %s116 = sphi 0, %s118
      %s119 = sphi 0, %s116
      %s120 = sphi 0, %s119
      %s136 = sphi 0, %s120
      %s144 = sphi 0, %s146
      %s147 = sphi 0, %s144
      %s148 = sphi 0, %s147
      %s164 = sphi 0, %s148
      %s172 = sphi 0, %s174
      %s175 = sphi 0, %s172
      %s176 = sphi 0, %s175
      %s192 = sphi 0, %s176
    $region4: #{tpu_custom_call.1} parent=1 // loop_header_branch
      %25 = sbr.rel (%p23) target = $region8
    $region5: #{tpu_custom_call.1} parent=1 // loop_body
      %s27 = ssub.s32 %s22, 1
      %s28 = ssub.s32 %s22, 2
      %s35 = sadd.s32 1, %s30
      %p36 = scmp.ge.s32.totalorder %s35, 1
      %s37 = scalar_select %p36, 0, %s35
      %s38 = sadd.s32 1, %s29
      %s39 = scalar_select %p36, %s38, %s29
      %p40 = scmp.ge.s32.totalorder %s39, 2
      %s41 = scalar_select %p40, 0, %s39
      %s42 = ssub.s32 %s29, %s41
      %s43 = ssub.s32 %s30, %s37
      %s44 = sor.u32 %s42, %s43
      %p45 = scmp.eq.s32.totalorder %s44, 0
      %s47 = sadd.s32 %s46, 1
      %s48 = scalar_select %p45, %s46, %s47
      %p51 = pneg %p45
      %p52 = scmp.eq.s32.totalorder %s22, 1
      %p53 = por %p51, %p52
      %p54 = scmp.ne.s32.totalorder %s46, %s49
      %p55 = scmp.eq.s32.totalorder %s22, 0
      %p56 = por %p54, %p55
      %p57 = scmp.ne.s32.totalorder %s46, %s49
      %p58 = scmp.eq.s32.totalorder %s27, 1
      %p59 = por %p57, %p58
      %p60 = scmp.ne.s32.totalorder %s49, %s50
      %p61 = scmp.eq.s32.totalorder %s27, 0
      %p62 = por %p60, %p61
      %p63 = scmp.ne.s32.totalorder %s49, %s50
      %p64 = scmp.eq.s32.totalorder %s28, 1
      %p65 = por %p63, %p64
      %p67 = scmp.ne.s32.totalorder %s50, %s66
      %p68 = scmp.eq.s32.totalorder %s28, 0
      %p69 = por %p67, %p68
      %s71 = sadd.s32 %s70, 1
      %p74 = scmp.eq.s32.totalorder %s22, 1
      %p75 = scmp.ne.s32.totalorder %s70, %s72
      %p76 = scmp.eq.s32.totalorder %s22, 0
      %p77 = por %p75, %p76
      %p78 = scmp.ne.s32.totalorder %s70, %s72
      %p79 = scmp.eq.s32.totalorder %s27, 1
      %p80 = por %p78, %p79
      %p81 = scmp.ne.s32.totalorder %s72, %s73
      %p82 = scmp.eq.s32.totalorder %s27, 0
      %p83 = por %p81, %p82
      %p84 = scmp.ne.s32.totalorder %s72, %s73
      %p85 = scmp.eq.s32.totalorder %s28, 1
      %p86 = por %p84, %p85
      %p88 = scmp.ne.s32.totalorder %s73, %s87
      %p89 = scmp.eq.s32.totalorder %s28, 0
      %p90 = por %p88, %p89
      %s92 = sadd.s32 %s91, 1
      %p95 = scmp.eq.s32.totalorder %s22, 1
      %p96 = scmp.ne.s32.totalorder %s91, %s93
      %p97 = scmp.eq.s32.totalorder %s22, 0
      %p98 = por %p96, %p97
      %p99 = scmp.ne.s32.totalorder %s91, %s93
      %p100 = scmp.eq.s32.totalorder %s27, 1
      %p101 = por %p99, %p100
      %p102 = scmp.ne.s32.totalorder %s93, %s94
      %p103 = scmp.eq.s32.totalorder %s27, 0
      %p104 = por %p102, %p103
      %p105 = scmp.ne.s32.totalorder %s93, %s94
      %p106 = scmp.eq.s32.totalorder %s28, 1
      %p107 = por %p105, %p106
      %p109 = scmp.ne.s32.totalorder %s94, %s108
      %p110 = scmp.eq.s32.totalorder %s28, 0
      %p111 = por %p109, %p110
      %s112 = ssub.s32 %s29, %s41
      %s113 = ssub.s32 %s30, %s37
      %s114 = sor.u32 %s112, %s113
      %p115 = scmp.eq.s32.totalorder %s114, 0
      %s117 = sadd.s32 %s116, 1
      %s118 = scalar_select %p115, %s116, %s117
      %p121 = pneg %p115
      %p122 = scmp.eq.s32.totalorder %s22, 1
      %p123 = por %p121, %p122
      %p124 = scmp.ne.s32.totalorder %s116, %s119
      %p125 = scmp.eq.s32.totalorder %s22, 0
      %p126 = por %p124, %p125
      %p127 = scmp.ne.s32.totalorder %s116, %s119
      %p128 = scmp.eq.s32.totalorder %s27, 1
      %p129 = por %p127, %p128
      %p130 = scmp.ne.s32.totalorder %s119, %s120
      %p131 = scmp.eq.s32.totalorder %s27, 0
      %p132 = por %p130, %p131
      %p133 = scmp.ne.s32.totalorder %s119, %s120
      %p134 = scmp.eq.s32.totalorder %s28, 1
      %p135 = por %p133, %p134
      %p137 = scmp.ne.s32.totalorder %s120, %s136
      %p138 = scmp.eq.s32.totalorder %s28, 0
      %p139 = por %p137, %p138
      %s140 = ssub.s32 %s29, %s41
      %s141 = ssub.s32 %s30, %s37
      %s142 = sor.u32 %s140, %s141
      %p143 = scmp.eq.s32.totalorder %s142, 0
      %s145 = sadd.s32 %s144, 1
      %s146 = scalar_select %p143, %s144, %s145
      %p149 = pneg %p143
      %p150 = scmp.eq.s32.totalorder %s22, 1
      %p151 = por %p149, %p150
      %p152 = scmp.ne.s32.totalorder %s144, %s147
      %p153 = scmp.eq.s32.totalorder %s22, 0
      %p154 = por %p152, %p153
      %p155 = scmp.ne.s32.totalorder %s144, %s147
      %p156 = scmp.eq.s32.totalorder %s27, 1
      %p157 = por %p155, %p156
      %p158 = scmp.ne.s32.totalorder %s147, %s148
      %p159 = scmp.eq.s32.totalorder %s27, 0
      %p160 = por %p158, %p159
      %p161 = scmp.ne.s32.totalorder %s147, %s148
      %p162 = scmp.eq.s32.totalorder %s28, 1
      %p163 = por %p161, %p162
      %p165 = scmp.ne.s32.totalorder %s148, %s164
      %p166 = scmp.eq.s32.totalorder %s28, 0
      %p167 = por %p165, %p166
      %s168 = ssub.s32 %s29, %s41
      %s169 = ssub.s32 %s30, %s37
      %s170 = sor.u32 %s168, %s169
      %p171 = scmp.eq.s32.totalorder %s170, 0
      %s173 = sadd.s32 %s172, 1
      %s174 = scalar_select %p171, %s172, %s173
      %p177 = pneg %p171
      %p178 = scmp.eq.s32.totalorder %s22, 1
      %p179 = por %p177, %p178
      %p180 = scmp.ne.s32.totalorder %s172, %s175
      %p181 = scmp.eq.s32.totalorder %s22, 0
      %p182 = por %p180, %p181
      %p183 = scmp.ne.s32.totalorder %s172, %s175
      %p184 = scmp.eq.s32.totalorder %s27, 1
      %p185 = por %p183, %p184
      %p186 = scmp.ne.s32.totalorder %s175, %s176
      %p187 = scmp.eq.s32.totalorder %s27, 0
      %p188 = por %p186, %p187
      %p189 = scmp.ne.s32.totalorder %s175, %s176
      %p190 = scmp.eq.s32.totalorder %s28, 1
      %p191 = por %p189, %p190
      %p193 = scmp.ne.s32.totalorder %s176, %s192
      %p194 = scmp.eq.s32.totalorder %s28, 0
      %p195 = por %p193, %p194
      %p196 = scmp.le.s32.totalorder 1, %s22
      %p197 = scmp.lt.s32.totalorder %s22, 3
      %p198 = pnand %p196, %p197
      %p199 = pneg %p198
      // Predicated region
      $region9: #{tpu_custom_call.1} parent=5 // pred_check
        _
      $region10: #{tpu_custom_call.1} parent=5 // pred_check_branch
        %201 = sbr.rel (%p198) target = $region12
      $region11: #{tpu_custom_call.1} parent=5 // pred_region
        %s202 = ssub.s32 %s22, 1
        // Predicated region
        $region13: #{tpu_custom_call.1} parent=11 // pred_check
          %p203 = pneg %p83
        $region14: #{tpu_custom_call.1} parent=11 // pred_check_branch
          %205 = sbr.rel (%p203) target = $region16
        $region15: #{tpu_custom_call.1} parent=11 // pred_region
          %207 = vsyncadd [#allocation6], 0
          %s208 = sshll.u32 %s1, 4
          %s209 = int_to_ptr.hbm [resolvable:$true] %s208
          %s210 = sshll.u32 [#allocation5], 4
          %s211 = int_to_ptr.vmem [resolvable:$true] %s210
          %216 = dma.hbm_to_vmem [thread:$0]  %s209, 256, %s211, [#allocation6], 64, 64, 4
        $region16: #{tpu_custom_call.1} parent=11 // pred_fallthru
          _
        // Predicated region
        $region17: #{tpu_custom_call.1} parent=11 // pred_check
          %p217 = pneg %p104
        $region18: #{tpu_custom_call.1} parent=11 // pred_check_branch
          %219 = sbr.rel (%p217) target = $region20
        $region19: #{tpu_custom_call.1} parent=11 // pred_region
          _
        $region20: #{tpu_custom_call.1} parent=11 // pred_fallthru
          _
      $region12: #{tpu_custom_call.1} parent=5 // pred_fallthru
        _
      %p220 = scmp.lt.s32.totalorder %s22, 2
      // Predicated region
      $region21: #{tpu_custom_call.1} parent=5 // pred_check
        %p221 = pneg %p220
      $region22: #{tpu_custom_call.1} parent=5 // pred_check_branch
        %223 = sbr.rel (%p221) target = $region24
      $region23: #{tpu_custom_call.1} parent=5 // pred_region
        // Predicated region
        $region25: #{tpu_custom_call.1} parent=23 // pred_check
          %p224 = pneg %p56
        $region26: #{tpu_custom_call.1} parent=23 // pred_check_branch
          %226 = sbr.rel (%p224) target = $region28
        $region27: #{tpu_custom_call.1} parent=23 // pred_region
          %s227 = sand.u32 %s46, 1
          %s228 = scalar_lea.sflag [#allocation3], %s227
          %s229 = sand.u32 %s46, 1
          %s230 = smul.addr %s229, 8
          %s231 = scalar_lea.vmem [#allocation2], %s230
          %233 = vsyncadd %s228, 0
          %s234 = sadd.s32 %s30, %s29
          %s235 = smul.addr %s234, 8
          %s236 = scalar_lea.hbm %s0, %s235
          %s238 = sshll.u32 %s236, 4
          %s239 = int_to_ptr.hbm [resolvable:$true] %s238
          %s240 = sshll.u32 %s231, 4
          %s241 = int_to_ptr.vmem [resolvable:$true] %s240
          %243 = dma.hbm_to_vmem [thread:$0]  %s239, 128, %s241, %s228
        $region28: #{tpu_custom_call.1} parent=23 // pred_fallthru
          _
      $region24: #{tpu_custom_call.1} parent=5 // pred_fallthru
        _
      %p244 = scmp.le.s32.totalorder 1, %s22
      %p245 = scmp.lt.s32.totalorder %s22, 3
      %p246 = pnand %p244, %p245
      %p247 = pneg %p246
      // Predicated region
      $region29: #{tpu_custom_call.1} parent=5 // pred_check
        _
      $region30: #{tpu_custom_call.1} parent=5 // pred_check_branch
        %249 = sbr.rel (%p246) target = $region32
      $region31: #{tpu_custom_call.1} parent=5 // pred_region
        %s250 = ssub.s32 %s22, 1
        %s251 = sand.u32 %s49, 1
        %s252 = scalar_lea.sflag [#allocation3], %s251
        %s253 = sand.u32 %s49, 1
        %s254 = smul.addr %s253, 8
        %s255 = scalar_lea.vmem [#allocation2], %s254
        // Predicated region
        $region33: #{tpu_custom_call.1} parent=31 // pred_check
          %p256 = pneg %p62
        $region34: #{tpu_custom_call.1} parent=31 // pred_check_branch
          %258 = sbr.rel (%p256) target = $region36
        $region35: #{tpu_custom_call.1} parent=31 // pred_region
          %260 = dma.done %s252, 128
        $region36: #{tpu_custom_call.1} parent=31 // pred_fallthru
          _
        // Predicated region
        $region37: #{tpu_custom_call.1} parent=31 // pred_check
          %p261 = pneg %p83
        $region38: #{tpu_custom_call.1} parent=31 // pred_check_branch
          %263 = sbr.rel (%p261) target = $region40
        $region39: #{tpu_custom_call.1} parent=31 // pred_region
          %265 = dma.done [#allocation6], 256
        $region40: #{tpu_custom_call.1} parent=31 // pred_fallthru
          _
        %s266 = sand.u32 %s49, 1
        %s267 = scalar_lea.sflag [#allocation3], %s266
        %s268 = sand.u32 %s49, 1
        %s269 = smul.addr %s268, 8
        %s270 = scalar_lea.vmem [#allocation2], %s269
        %p271 = pneg %p62
        %p272 = pneg %p59
        %p273 = pneg %p83
        %p274 = pneg %p80
        %p275 = pneg %p104
        %p276 = pneg %p101
        %p277 = pneg %p132
        %p278 = pneg %p129
        %s279 = sand.u32 %s119, 1
        %s280 = scalar_lea.sflag [#allocation4], %s279
        %s281 = sand.u32 %s119, 1
        %s282 = smul.addr %s281, 4
        %s283 = scalar_lea.vmem [#allocation7], %s282
        %p284 = pneg %p160
        %p285 = pneg %p157
        %s286 = sand.u32 %s27, 1
        %s287 = scalar_lea.sflag [#allocation9], %s286
        %s288 = sand.u32 %s147, 1
        %s289 = smul.addr %s288, 4
        %s290 = scalar_lea.vmem [#allocation8], %s289
        %p291 = pneg %p188
        %p292 = pneg %p185
        %s293 = sand.u32 %s27, 1
        %s294 = scalar_lea.sflag [#allocation9], %s293
        %s295 = sand.u32 %s175, 1
        %s296 = smul.addr %s295, 4
        %s297 = scalar_lea.vmem [#allocation10], %s296
        %v299 = vld [vmem:[%s255] sm:$0xff]
        %v300 = vpack.c.bf16 %v299, %v299
        %v301 = vld [vmem:[#allocation5] sm:$0xf]
        %v302 = vld [vmem:[#allocation5 + $0x4] sm:$0xf]
        %v303 = vld [vmem:[#allocation5 + $0x8] sm:$0xf]
        %v304 = vld [vmem:[#allocation5 + $0xc] sm:$0xf]
        %v305 = vld [vmem:[%s2] sm:$0x1]
        %v307 = vperm.slane %v305, 0
        %v313 = vunpack.c.l.b16 %v301
        %v314 = vunpack.c.l.b16 %v302
        %v315 = vunpack.c.l.b16 %v303
        %v316 = vunpack.c.l.b16 %v304
        %v317 = vpack.c.b16 %v314, %v313
        %v318 = vpack.c.b16 %v316, %v315
        %vm321 = vcmask 261120
        %v323 = vsel %vm321, %v300, 0
        %325 = vmatpush.bf16.msra.mxu0 0
        %326 = vmatpush.bf16.msra.mxu0 0
        %327 = vmatpush.bf16.msra.mxu0 0
        %328 = vmatpush.bf16.msra.mxu0 0
        %329 = vmatpush.bf16.msra.mxu0 0
        %330 = vmatpush.bf16.msra.mxu0 0
        %331 = vmatpush.bf16.msra.mxu0 %v318
        %332 = vmatpush.bf16.msra.mxu0 %v317
        %333 = vmatmul.bf16.gmra.mxu0 %v323
        %v334 = vpop.f32.mrf.mxu0
        %v335 = vadd.f32 %v307, %v334
        %v336 = vpop.f32.mrf.mxu0
        %337 = vdwg.mxu0
        %v338 = vmul.f32 %v335, 0.35355338
        %v339 = vpack.c.bf16 %v338, %v338
        %vm340 = vcmask 257024
        %341 = vst.msk [vmem:[%s283] sm:$0xf] %vm340, %v339
        %v342 = vpack.c.bf16 %v335, %v335
        %344 = vrot.lane.b32.xlu0 %v342, 96
        %v345 = vpop.permute.xlu0 %344
        %347 = vst.msk [vmem:[%s290] sm:$0xf] %vm340, %v345
        %348 = vrot.lane.b32.xlu0 %v342, 64
        %v349 = vpop.permute.xlu0 %348
        %351 = vst.msk [vmem:[%s297] sm:$0xf] %vm340, %v349
        %s352 = sand.u32 %s119, 1
        %s353 = scalar_lea.sflag [#allocation4], %s352
        %s354 = sand.u32 %s119, 1
        %s355 = smul.addr %s354, 4
        %s356 = scalar_lea.vmem [#allocation7], %s355
        %s357 = sand.u32 %s27, 1
        %s358 = scalar_lea.sflag [#allocation9], %s357
        %s359 = sand.u32 %s147, 1
        %s360 = smul.addr %s359, 4
        %s361 = scalar_lea.vmem [#allocation8], %s360
        %s362 = sand.u32 %s27, 1
        %s363 = scalar_lea.sflag [#allocation9], %s362
        %s364 = sand.u32 %s175, 1
        %s365 = smul.addr %s364, 4
        %s366 = scalar_lea.vmem [#allocation10], %s365
        // Predicated region
        $region41: #{tpu_custom_call.1} parent=31 // pred_check
          %p367 = pneg %p129
        $region42: #{tpu_custom_call.1} parent=31 // pred_check_branch
          %369 = sbr.rel (%p367) target = $region44
        $region43: #{tpu_custom_call.1} parent=31 // pred_region
          %371 = vsyncadd %s353, 0
          %s372 = sadd.s32 %s32, %s31
          %s373 = smul.addr %s372, 4
          %s374 = scalar_lea.hbm %s3, %s373
          %s376 = sshll.u32 %s356, 4
          %s377 = int_to_ptr.vmem [resolvable:$true] %s376
          %s378 = sshll.u32 %s374, 4
          %s379 = int_to_ptr.hbm [resolvable:$true] %s378
          %381 = dma.vmem_to_hbm [thread:$0]  %s377, 64, %s379, %s353
        $region44: #{tpu_custom_call.1} parent=31 // pred_fallthru
          _
        // Predicated region
        $region45: #{tpu_custom_call.1} parent=31 // pred_check
          %p382 = pneg %p157
        $region46: #{tpu_custom_call.1} parent=31 // pred_check_branch
          %384 = sbr.rel (%p382) target = $region48
        $region47: #{tpu_custom_call.1} parent=31 // pred_region
          %386 = vsyncadd %s358, 0
          %s387 = sadd.s32 %s32, %s31
          %s388 = smul.addr %s387, 4
          %s389 = scalar_lea.hbm %s4, %s388
          %s391 = sshll.u32 %s361, 4
          %s392 = int_to_ptr.vmem [resolvable:$true] %s391
          %s393 = sshll.u32 %s389, 4
          %s394 = int_to_ptr.hbm [resolvable:$true] %s393
          %396 = dma.vmem_to_hbm [thread:$0]  %s392, 64, %s394, %s358
        $region48: #{tpu_custom_call.1} parent=31 // pred_fallthru
          _
        // Predicated region
        $region49: #{tpu_custom_call.1} parent=31 // pred_check
          %p397 = pneg %p185
        $region50: #{tpu_custom_call.1} parent=31 // pred_check_branch
          %399 = sbr.rel (%p397) target = $region52
        $region51: #{tpu_custom_call.1} parent=31 // pred_region
          %401 = vsyncadd %s363, 0
          %s402 = sadd.s32 %s32, %s31
          %s403 = smul.addr %s402, 4
          %s404 = scalar_lea.hbm %s5, %s403
          %s406 = sshll.u32 %s366, 4
          %s407 = int_to_ptr.vmem [resolvable:$true] %s406
          %s408 = sshll.u32 %s404, 4
          %s409 = int_to_ptr.hbm [resolvable:$true] %s408
          %411 = dma.vmem_to_hbm [thread:$0]  %s407, 64, %s409, %s363
        $region52: #{tpu_custom_call.1} parent=31 // pred_fallthru
          _
      $region32: #{tpu_custom_call.1} parent=5 // pred_fallthru
        _
      %p412 = scmp.le.s32.totalorder 2, %s22
      // Predicated region
      $region53: #{tpu_custom_call.1} parent=5 // pred_check
        %p413 = pneg %p412
      $region54: #{tpu_custom_call.1} parent=5 // pred_check_branch
        %415 = sbr.rel (%p413) target = $region56
      $region55: #{tpu_custom_call.1} parent=5 // pred_region
        %s416 = ssub.s32 %s22, 2
        // Predicated region
        $region57: #{tpu_custom_call.1} parent=55 // pred_check
          %p417 = pneg %p135
        $region58: #{tpu_custom_call.1} parent=55 // pred_check_branch
          %419 = sbr.rel (%p417) target = $region60
        $region59: #{tpu_custom_call.1} parent=55 // pred_region
          %s420 = sand.u32 %s120, 1
          %s421 = scalar_lea.sflag [#allocation4], %s420
          %s422 = sand.u32 %s120, 1
          %s423 = smul.addr %s422, 4
          %s424 = scalar_lea.vmem [#allocation7], %s423
          %426 = dma.done %s421, 64
        $region60: #{tpu_custom_call.1} parent=55 // pred_fallthru
          _
        // Predicated region
        $region61: #{tpu_custom_call.1} parent=55 // pred_check
          %p427 = pneg %p163
        $region62: #{tpu_custom_call.1} parent=55 // pred_check_branch
          %429 = sbr.rel (%p427) target = $region64
        $region63: #{tpu_custom_call.1} parent=55 // pred_region
          %s430 = sand.u32 %s28, 1
          %s431 = scalar_lea.sflag [#allocation9], %s430
          %s432 = sand.u32 %s148, 1
          %s433 = smul.addr %s432, 4
          %s434 = scalar_lea.vmem [#allocation8], %s433
          %436 = dma.done %s431, 64
        $region64: #{tpu_custom_call.1} parent=55 // pred_fallthru
          _
        // Predicated region
        $region65: #{tpu_custom_call.1} parent=55 // pred_check
          %p437 = pneg %p191
        $region66: #{tpu_custom_call.1} parent=55 // pred_check_branch
          %439 = sbr.rel (%p437) target = $region68
        $region67: #{tpu_custom_call.1} parent=55 // pred_region
          %s440 = sand.u32 %s28, 1
          %s441 = scalar_lea.sflag [#allocation9], %s440
          %s442 = sand.u32 %s176, 1
          %s443 = smul.addr %s442, 4
          %s444 = scalar_lea.vmem [#allocation10], %s443
          %446 = dma.done %s441, 64
        $region68: #{tpu_custom_call.1} parent=55 // pred_fallthru
          _
      $region56: #{tpu_custom_call.1} parent=5 // pred_fallthru
        _
    $region6: #{tpu_custom_call.1} parent=1 // loop_footer
      %s26 = sadd.s32 1, %s22
    $region7: #{tpu_custom_call.1} parent=1 // loop_footer_branch
      %21 = sbr.rel target = $region3
    $region8: #{tpu_custom_call.1} parent=1 // loop_exit
      _
    %447 = vsyncpa [#allocation3], 1
    %s448 = scalar_lea.sflag [#allocation3], 1
    %449 = vsyncpa %s448, 1
    %450 = vsyncpa [#allocation6], 1
    %451 = vsyncpa [#allocation4], 1
    %s452 = scalar_lea.sflag [#allocation4], 1
    %453 = vsyncpa %s452, 1
    %454 = vsyncpa [#allocation9], 1
    %s455 = scalar_lea.sflag [#allocation9], 1
    %456 = vsyncpa %s455, 1

// kernel: tpu_custom_call.1
$region0: #{tpu_custom_call.1}
  #allocation0 [shape = 'u32[]', space=smem, size = 0x4, offset = 0x4, fixed_abs, tag = 'smem constant byte address 0x4 - core index']
  #allocation1 [shape = 'u32[72,128]{1,0:T(1,128)}', space=vmem, size = 0x9000, scoped, tag = 'internal scratch']
  %s0 = inlined_call_operand.hbm [shape: f32[2,8,32], index: 0, kind: input, shape index: {}]
  %s1 = inlined_call_operand.hbm [shape: bf16[32,96], index: 1, kind: input, shape index: {}]
  %s2 = inlined_call_operand.vmem [shape: f32[1,96], index: 2, kind: input, shape index: {}]
  %s3 = inlined_call_operand.hbm [shape: bf16[2,8,32], index: 3, kind: output, shape index: {0}]
  %s4 = inlined_call_operand.hbm [shape: bf16[2,8,32], index: 4, kind: output, shape index: {1}]
  %s5 = inlined_call_operand.hbm [shape: bf16[2,8,32], index: 5, kind: output, shape index: {2}]
  %6 = xla_tuple %s3, %s4, %s5
  %s7 = sld [smem:[#allocation0]]
  $region69: #{tpu_custom_call.1} parent=0
    _
  %s9 = ssub.s32 1, %s7
  %s10 = scalar_select 0, %s9, %s7
  $region1: #{tpu_custom_call.1} parent=0
    #allocation2 [shape = 'u8[8192]{0}', space=vmem, size = 0x2000, scoped, tag = 'input window, operand 0']
    #allocation3 [shape = 's32[2]{0}', space=sflag, size = 0x8, scoped, tag = 'scoped memory for tpu_custom_call.1']
    #allocation4 [shape = 's32[2]{0}', space=sflag, size = 0x8, scoped, tag = 'scoped memory for tpu_custom_call.1']
    #allocation5 [shape = 'u8[8192]{0}', space=vmem, size = 0x2000, scoped, tag = 'input window, operand 1, single buffered']
    #allocation6 [shape = 's32[1]{0}', space=sflag, size = 0x4, scoped, tag = 'scoped memory for tpu_custom_call.1']
    #allocation7 [shape = 'u8[4096]{0}', space=vmem, size = 0x1000, scoped, tag = 'output window, operand 0']
    #allocation8 [shape = 'u8[4096]{0}', space=vmem, size = 0x1000, scoped, tag = 'output window, operand 1']
    #allocation9 [shape = 's32[2]{0}', space=sflag, size = 0x8, scoped, tag = 'scoped memory for tpu_custom_call.1']
    #allocation10 [shape = 'u8[4096]{0}', space=vmem, size = 0x1000, scoped, tag = 'output window, operand 2']
    %11 = vsyncpa [#allocation3], 0
    %s12 = scalar_lea.sflag [#allocation3], 1
    %13 = vsyncpa %s12, 0
    %14 = vsyncpa [#allocation6], 0
    %15 = vsyncpa [#allocation4], 0
    %s16 = scalar_lea.sflag [#allocation4], 1
    %17 = vsyncpa %s16, 0
    %18 = vsyncpa [#allocation9], 0
    %s19 = scalar_lea.sflag [#allocation9], 1
    %20 = vsyncpa %s19, 0
    loop: start=0, step=1, limit=4
    $region2: #{tpu_custom_call.1} parent=1 // loop_pre_header
      _
    $region3: #{tpu_custom_call.1} parent=1 // loop_header
      %s22 = sphi 0, %s26
      %p23 = scmp.ge.s32.totalorder %s22, 4
      %s29 = sphi 0, %s41
      %s30 = sphi 0, %s37
      %s31 = sphi 0, %s29
      %s32 = sphi 0, %s30
      %s33 = sphi 0, %s31
      %s34 = sphi 0, %s32
      %s46 = sphi 0, %s48
      %s49 = sphi 0, %s46
      %s50 = sphi 0, %s49
      %s66 = sphi 0, %s50
      %s70 = sphi 0, %s70
      %s72 = sphi 0, %s70
      %s73 = sphi 0, %s72
      %s87 = sphi 0, %s73
      %s91 = sphi 0, %s91
      %s93 = sphi 0, %s91
      %s94 = sphi 0, %s93
      %s108 = sphi 0, %s94
      %s116 = sphi 0, %s118
      %s119 = sphi 0, %s116
      %s120 = sphi 0, %s119
      %s136 = sphi 0, %s120
      %s144 = sphi 0, %s146
      %s147 = sphi 0, %s144
      %s148 = sphi 0, %s147
      %s164 = sphi 0, %s148
      %s172 = sphi 0, %s174
      %s175 = sphi 0, %s172
      %s176 = sphi 0, %s175
      %s192 = sphi 0, %s176
    $region4: #{tpu_custom_call.1} parent=1 // loop_header_branch
      %25 = sbr.rel (%p23) target = $region8
    $region5: #{tpu_custom_call.1} parent=1 // loop_body
      %s27 = ssub.s32 %s22, 1
      %s28 = ssub.s32 %s22, 2
      %s35 = sadd.s32 1, %s30
      %p36 = scmp.ge.s32.totalorder %s35, 1
      %s37 = scalar_select %p36, 0, %s35
      %s38 = sadd.s32 1, %s29
      %s39 = scalar_select %p36, %s38, %s29
      %p40 = scmp.ge.s32.totalorder %s39, 2
      %s41 = scalar_select %p40, 0, %s39
      %s42 = ssub.s32 %s29, %s41
      %s43 = ssub.s32 %s30, %s37
      %s44 = sor.u32 %s42, %s43
      %p45 = scmp.eq.s32.totalorder %s44, 0
      %s47 = sadd.s32 %s46, 1
      %s48 = scalar_select %p45, %s46, %s47
      %p51 = pneg %p45
      %p52 = scmp.eq.s32.totalorder %s22, 1
      %p53 = por %p51, %p52
      %p54 = scmp.ne.s32.totalorder %s46, %s49
      %p55 = scmp.eq.s32.totalorder %s22, 0
      %p56 = por %p54, %p55
      %p57 = scmp.ne.s32.totalorder %s46, %s49
      %p58 = scmp.eq.s32.totalorder %s27, 1
      %p59 = por %p57, %p58
      %p60 = scmp.ne.s32.totalorder %s49, %s50
      %p61 = scmp.eq.s32.totalorder %s27, 0
      %p62 = por %p60, %p61
      %p63 = scmp.ne.s32.totalorder %s49, %s50
      %p64 = scmp.eq.s32.totalorder %s28, 1
      %p65 = por %p63, %p64
      %p67 = scmp.ne.s32.totalorder %s50, %s66
      %p68 = scmp.eq.s32.totalorder %s28, 0
      %p69 = por %p67, %p68
      %s71 = sadd.s32 %s70, 1
      %p74 = scmp.eq.s32.totalorder %s22, 1
      %p75 = scmp.ne.s32.totalorder %s70, %s72
      %p76 = scmp.eq.s32.totalorder %s22, 0
      %p77 = por %p75, %p76
      %p78 = scmp.ne.s32.totalorder %s70, %s72
      %p79 = scmp.eq.s32.totalorder %s27, 1
      %p80 = por %p78, %p79
      %p81 = scmp.ne.s32.totalorder %s72, %s73
      %p82 = scmp.eq.s32.totalorder %s27, 0
      %p83 = por %p81, %p82
      %p84 = scmp.ne.s32.totalorder %s72, %s73
      %p85 = scmp.eq.s32.totalorder %s28, 1
      %p86 = por %p84, %p85
      %p88 = scmp.ne.s32.totalorder %s73, %s87
      %p89 = scmp.eq.s32.totalorder %s28, 0
      %p90 = por %p88, %p89
      %s92 = sadd.s32 %s91, 1
      %p95 = scmp.eq.s32.totalorder %s22, 1
      %p96 = scmp.ne.s32.totalorder %s91, %s93
      %p97 = scmp.eq.s32.totalorder %s22, 0
      %p98 = por %p96, %p97
      %p99 = scmp.ne.s32.totalorder %s91, %s93
      %p100 = scmp.eq.s32.totalorder %s27, 1
      %p101 = por %p99, %p100
      %p102 = scmp.ne.s32.totalorder %s93, %s94
      %p103 = scmp.eq.s32.totalorder %s27, 0
      %p104 = por %p102, %p103
      %p105 = scmp.ne.s32.totalorder %s93, %s94
      %p106 = scmp.eq.s32.totalorder %s28, 1
      %p107 = por %p105, %p106
      %p109 = scmp.ne.s32.totalorder %s94, %s108
      %p110 = scmp.eq.s32.totalorder %s28, 0
      %p111 = por %p109, %p110
      %s112 = ssub.s32 %s29, %s41
      %s113 = ssub.s32 %s30, %s37
      %s114 = sor.u32 %s112, %s113
      %p115 = scmp.eq.s32.totalorder %s114, 0
      %s117 = sadd.s32 %s116, 1
      %s118 = scalar_select %p115, %s116, %s117
      %p121 = pneg %p115
      %p122 = scmp.eq.s32.totalorder %s22, 1
      %p123 = por %p121, %p122
      %p124 = scmp.ne.s32.totalorder %s116, %s119
      %p125 = scmp.eq.s32.totalorder %s22, 0
      %p126 = por %p124, %p125
      %p127 = scmp.ne.s32.totalorder %s116, %s119
      %p128 = scmp.eq.s32.totalorder %s27, 1
      %p129 = por %p127, %p128
      %p130 = scmp.ne.s32.totalorder %s119, %s120
      %p131 = scmp.eq.s32.totalorder %s27, 0
      %p132 = por %p130, %p131
      %p133 = scmp.ne.s32.totalorder %s119, %s120
      %p134 = scmp.eq.s32.totalorder %s28, 1
      %p135 = por %p133, %p134
      %p137 = scmp.ne.s32.totalorder %s120, %s136
      %p138 = scmp.eq.s32.totalorder %s28, 0
      %p139 = por %p137, %p138
      %s140 = ssub.s32 %s29, %s41
      %s141 = ssub.s32 %s30, %s37
      %s142 = sor.u32 %s140, %s141
      %p143 = scmp.eq.s32.totalorder %s142, 0
      %s145 = sadd.s32 %s144, 1
      %s146 = scalar_select %p143, %s144, %s145
      %p149 = pneg %p143
      %p150 = scmp.eq.s32.totalorder %s22, 1
      %p151 = por %p149, %p150
      %p152 = scmp.ne.s32.totalorder %s144, %s147
      %p153 = scmp.eq.s32.totalorder %s22, 0
      %p154 = por %p152, %p153
      %p155 = scmp.ne.s32.totalorder %s144, %s147
      %p156 = scmp.eq.s32.totalorder %s27, 1
      %p157 = por %p155, %p156
      %p158 = scmp.ne.s32.totalorder %s147, %s148
      %p159 = scmp.eq.s32.totalorder %s27, 0
      %p160 = por %p158, %p159
      %p161 = scmp.ne.s32.totalorder %s147, %s148
      %p162 = scmp.eq.s32.totalorder %s28, 1
      %p163 = por %p161, %p162
      %p165 = scmp.ne.s32.totalorder %s148, %s164
      %p166 = scmp.eq.s32.totalorder %s28, 0
      %p167 = por %p165, %p166
      %s168 = ssub.s32 %s29, %s41
      %s169 = ssub.s32 %s30, %s37
      %s170 = sor.u32 %s168, %s169
      %p171 = scmp.eq.s32.totalorder %s170, 0
      %s173 = sadd.s32 %s172, 1
      %s174 = scalar_select %p171, %s172, %s173
      %p177 = pneg %p171
      %p178 = scmp.eq.s32.totalorder %s22, 1
      %p179 = por %p177, %p178
      %p180 = scmp.ne.s32.totalorder %s172, %s175
      %p181 = scmp.eq.s32.totalorder %s22, 0
      %p182 = por %p180, %p181
      %p183 = scmp.ne.s32.totalorder %s172, %s175
      %p184 = scmp.eq.s32.totalorder %s27, 1
      %p185 = por %p183, %p184
      %p186 = scmp.ne.s32.totalorder %s175, %s176
      %p187 = scmp.eq.s32.totalorder %s27, 0
      %p188 = por %p186, %p187
      %p189 = scmp.ne.s32.totalorder %s175, %s176
      %p190 = scmp.eq.s32.totalorder %s28, 1
      %p191 = por %p189, %p190
      %p193 = scmp.ne.s32.totalorder %s176, %s192
      %p194 = scmp.eq.s32.totalorder %s28, 0
      %p195 = por %p193, %p194
      %p196 = scmp.le.s32.totalorder 1, %s22
      %p197 = scmp.lt.s32.totalorder %s22, 3
      %p198 = pnand %p196, %p197
      %p199 = pneg %p198
      // Predicated region
      $region9: #{tpu_custom_call.1} parent=5 // pred_check
        _
      $region10: #{tpu_custom_call.1} parent=5 // pred_check_branch
        %201 = sbr.rel (%p198) target = $region12
      $region11: #{tpu_custom_call.1} parent=5 // pred_region
        %s202 = ssub.s32 %s22, 1
        // Predicated region
        $region13: #{tpu_custom_call.1} parent=11 // pred_check
          %p203 = pneg %p83
        $region14: #{tpu_custom_call.1} parent=11 // pred_check_branch
          %205 = sbr.rel (%p203) target = $region16
        $region15: #{tpu_custom_call.1} parent=11 // pred_region
          %207 = vsyncadd [#allocation6], 0
          %s208 = sshll.u32 %s1, 4
          %s209 = int_to_ptr.hbm [resolvable:$true] %s208
          %s210 = sshll.u32 [#allocation5], 4
          %s211 = int_to_ptr.vmem [resolvable:$true] %s210
          %216 = dma.hbm_to_vmem [thread:$0]  %s209, 256, %s211, [#allocation6], 64, 64, 4
        $region16: #{tpu_custom_call.1} parent=11 // pred_fallthru
          _
        // Predicated region
        $region17: #{tpu_custom_call.1} parent=11 // pred_check
          %p217 = pneg %p104
        $region18: #{tpu_custom_call.1} parent=11 // pred_check_branch
          %219 = sbr.rel (%p217) target = $region20
        $region19: #{tpu_custom_call.1} parent=11 // pred_region
          _
        $region20: #{tpu_custom_call.1} parent=11 // pred_fallthru
          _
      $region12: #{tpu_custom_call.1} parent=5 // pred_fallthru
        _
      %p220 = scmp.lt.s32.totalorder %s22, 2
      // Predicated region
      $region21: #{tpu_custom_call.1} parent=5 // pred_check
        %p221 = pneg %p220
      $region22: #{tpu_custom_call.1} parent=5 // pred_check_branch
        %223 = sbr.rel (%p221) target = $region24
      $region23: #{tpu_custom_call.1} parent=5 // pred_region
        // Predicated region
        $region25: #{tpu_custom_call.1} parent=23 // pred_check
          %p224 = pneg %p56
        $region26: #{tpu_custom_call.1} parent=23 // pred_check_branch
          %226 = sbr.rel (%p224) target = $region28
        $region27: #{tpu_custom_call.1} parent=23 // pred_region
          %s227 = sand.u32 %s46, 1
          %s228 = scalar_lea.sflag [#allocation3], %s227
          %s229 = sand.u32 %s46, 1
          %s230 = smul.addr %s229, 8
          %s231 = scalar_lea.vmem [#allocation2], %s230
          %233 = vsyncadd %s228, 0
          %s234 = sadd.s32 %s30, %s29
          %s235 = smul.addr %s234, 8
          %s236 = scalar_lea.hbm %s0, %s235
          %s238 = sshll.u32 %s236, 4
          %s239 = int_to_ptr.hbm [resolvable:$true] %s238
          %s240 = sshll.u32 %s231, 4
          %s241 = int_to_ptr.vmem [resolvable:$true] %s240
          %243 = dma.hbm_to_vmem [thread:$0]  %s239, 128, %s241, %s228
        $region28: #{tpu_custom_call.1} parent=23 // pred_fallthru
          _
      $region24: #{tpu_custom_call.1} parent=5 // pred_fallthru
        _
      %p244 = scmp.le.s32.totalorder 1, %s22
      %p245 = scmp.lt.s32.totalorder %s22, 3
      %p246 = pnand %p244, %p245
      %p247 = pneg %p246
      // Predicated region
      $region29: #{tpu_custom_call.1} parent=5 // pred_check
        _
      $region30: #{tpu_custom_call.1} parent=5 // pred_check_branch
        %249 = sbr.rel (%p246) target = $region32
      $region31: #{tpu_custom_call.1} parent=5 // pred_region
        %s250 = ssub.s32 %s22, 1
        %s251 = sand.u32 %s49, 1
        %s252 = scalar_lea.sflag [#allocation3], %s251
        %s253 = sand.u32 %s49, 1
        %s254 = smul.addr %s253, 8
        %s255 = scalar_lea.vmem [#allocation2], %s254
        // Predicated region
        $region33: #{tpu_custom_call.1} parent=31 // pred_check
          %p256 = pneg %p62
        $region34: #{tpu_custom_call.1} parent=31 // pred_check_branch
          %258 = sbr.rel (%p256) target = $region36
        $region35: #{tpu_custom_call.1} parent=31 // pred_region
          %260 = dma.done %s252, 128
        $region36: #{tpu_custom_call.1} parent=31 // pred_fallthru
          _
        // Predicated region
        $region37: #{tpu_custom_call.1} parent=31 // pred_check
          %p261 = pneg %p83
        $region38: #{tpu_custom_call.1} parent=31 // pred_check_branch
          %263 = sbr.rel (%p261) target = $region40
        $region39: #{tpu_custom_call.1} parent=31 // pred_region
          %265 = dma.done [#allocation6], 256
        $region40: #{tpu_custom_call.1} parent=31 // pred_fallthru
          _
        %s266 = sand.u32 %s49, 1
        %s267 = scalar_lea.sflag [#allocation3], %s266
        %s268 = sand.u32 %s49, 1
        %s269 = smul.addr %s268, 8
        %s270 = scalar_lea.vmem [#allocation2], %s269
        %p271 = pneg %p62
        %p272 = pneg %p59
        %p273 = pneg %p83
        %p274 = pneg %p80
        %p275 = pneg %p104
        %p276 = pneg %p101
        %p277 = pneg %p132
        %p278 = pneg %p129
        %s279 = sand.u32 %s119, 1
        %s280 = scalar_lea.sflag [#allocation4], %s279
        %s281 = sand.u32 %s119, 1
        %s282 = smul.addr %s281, 4
        %s283 = scalar_lea.vmem [#allocation7], %s282
        %p284 = pneg %p160
        %p285 = pneg %p157
        %s286 = sand.u32 %s27, 1
        %s287 = scalar_lea.sflag [#allocation9], %s286
        %s288 = sand.u32 %s147, 1
        %s289 = smul.addr %s288, 4
        %s290 = scalar_lea.vmem [#allocation8], %s289
        %p291 = pneg %p188
        %p292 = pneg %p185
        %s293 = sand.u32 %s27, 1
        %s294 = scalar_lea.sflag [#allocation9], %s293
        %s295 = sand.u32 %s175, 1
        %s296 = smul.addr %s295, 4
        %s297 = scalar_lea.vmem [#allocation10], %s296
        %v299 = vld [vmem:[%s255] sm:$0xff]
        %v300 = vpack.c.bf16 %v299, %v299
        %v301 = vld [vmem:[#allocation5] sm:$0xf]
        %v302 = vld [vmem:[#allocation5 + $0x4] sm:$0xf]
        %v303 = vld [vmem:[#allocation5 + $0x8] sm:$0xf]
        %v304 = vld [vmem:[#allocation5 + $0xc] sm:$0xf]
        %v305 = vld [vmem:[%s2] sm:$0x1]
        %v307 = vperm.slane %v305, 0
        %v313 = vunpack.c.l.b16 %v301
        %v314 = vunpack.c.l.b16 %v302
        %v315 = vunpack.c.l.b16 %v303
        %v316 = vunpack.c.l.b16 %v304
        %v317 = vpack.c.b16 %v314, %v313
        %v318 = vpack.c.b16 %v316, %v315
        %vm321 = vcmask 261120
        %v323 = vsel %vm321, %v300, 0
        %325 = vmatpush.bf16.msra.mxu0 0
        %326 = vmatpush.bf16.msra.mxu0 0
        %327 = vmatpush.bf16.msra.mxu0 0
        %328 = vmatpush.bf16.msra.mxu0 0
        %329 = vmatpush.bf16.msra.mxu0 0
        %330 = vmatpush.bf16.msra.mxu0 0
        %331 = vmatpush.bf16.msra.mxu0 %v318
        %332 = vmatpush.bf16.msra.mxu0 %v317
        %333 = vmatmul.bf16.gmra.mxu0 %v323
        %v334 = vpop.f32.mrf.mxu0
        %v335 = vadd.f32 %v307, %v334
        %v336 = vpop.f32.mrf.mxu0
        %337 = vdwg.mxu0
        %v338 = vmul.f32 %v335, 0.35355338
        %v339 = vpack.c.bf16 %v338, %v338
        %vm340 = vcmask 257024
        %341 = vst.msk [vmem:[%s283] sm:$0xf] %vm340, %v339
        %v342 = vpack.c.bf16 %v335, %v335
        %344 = vrot.lane.b32.xlu0 %v342, 96
        %v345 = vpop.permute.xlu0 %344
        %347 = vst.msk [vmem:[%s290] sm:$0xf] %vm340, %v345
        %348 = vrot.lane.b32.xlu0 %v342, 64
        %v349 = vpop.permute.xlu0 %348
        %351 = vst.msk [vmem:[%s297] sm:$0xf] %vm340, %v349
        %s352 = sand.u32 %s119, 1
        %s353 = scalar_lea.sflag [#allocation4], %s352
        %s354 = sand.u32 %s119, 1
        %s355 = smul.addr %s354, 4
        %s356 = scalar_lea.vmem [#allocation7], %s355
        %s357 = sand.u32 %s27, 1
        %s358 = scalar_lea.sflag [#allocation9], %s357
        %s359 = sand.u32 %s147, 1
        %s360 = smul.addr %s359, 4
        %s361 = scalar_lea.vmem [#allocation8], %s360
        %s362 = sand.u32 %s27, 1
        %s363 = scalar_lea.sflag [#allocation9], %s362
        %s364 = sand.u32 %s175, 1
        %s365 = smul.addr %s364, 4
        %s366 = scalar_lea.vmem [#allocation10], %s365
        // Predicated region
        $region41: #{tpu_custom_call.1} parent=31 // pred_check
          %p367 = pneg %p129
        $region42: #{tpu_custom_call.1} parent=31 // pred_check_branch
          %369 = sbr.rel (%p367) target = $region44
        $region43: #{tpu_custom_call.1} parent=31 // pred_region
          %371 = vsyncadd %s353, 0
          %s372 = sadd.s32 %s32, %s31
          %s373 = smul.addr %s372, 4
          %s374 = scalar_lea.hbm %s3, %s373
          %s376 = sshll.u32 %s356, 4
          %s377 = int_to_ptr.vmem [resolvable:$true] %s376
          %s378 = sshll.u32 %s374, 4
          %s379 = int_to_ptr.hbm [resolvable:$true] %s378
          %381 = dma.vmem_to_hbm [thread:$0]  %s377, 64, %s379, %s353
        $region44: #{tpu_custom_call.1} parent=31 // pred_fallthru
          _
        // Predicated region
        $region45: #{tpu_custom_call.1} parent=31 // pred_check
          %p382 = pneg %p157
        $region46: #{tpu_custom_call.1} parent=31 // pred_check_branch
          %384 = sbr.rel (%p382) target = $region48
        $region47: #{tpu_custom_call.1} parent=31 // pred_region
          %386 = vsyncadd %s358, 0
          %s387 = sadd.s32 %s32, %s31
          %s388 = smul.addr %s387, 4
          %s389 = scalar_lea.hbm %s4, %s388
          %s391 = sshll.u32 %s361, 4
          %s392 = int_to_ptr.vmem [resolvable:$true] %s391
          %s393 = sshll.u32 %s389, 4
          %s394 = int_to_ptr.hbm [resolvable:$true] %s393
          %396 = dma.vmem_to_hbm [thread:$0]  %s392, 64, %s394, %s358
        $region48: #{tpu_custom_call.1} parent=31 // pred_fallthru
          _
        // Predicated region
        $region49: #{tpu_custom_call.1} parent=31 // pred_check
          %p397 = pneg %p185
        $region50: #{tpu_custom_call.1} parent=31 // pred_check_branch
          %399 = sbr.rel (%p397) target = $region52
        $region51: #{tpu_custom_call.1} parent=31 // pred_region
          %401 = vsyncadd %s363, 0
          %s402 = sadd.s32 %s32, %s31
          %s403 = smul.addr %s402, 4
          %s404 = scalar_lea.hbm %s5, %s403
          %s406 = sshll.u32 %s366, 4
          %s407 = int_to_ptr.vmem [resolvable:$true] %s406
          %s408 = sshll.u32 %s404, 4
          %s409 = int_to_ptr.hbm [resolvable:$true] %s408
          %411 = dma.vmem_to_hbm [thread:$0]  %s407, 64, %s409, %s363
        $region52: #{tpu_custom_call.1} parent=31 // pred_fallthru
          _
      $region32: #{tpu_custom_call.1} parent=5 // pred_fallthru
        _
      %p412 = scmp.le.s32.totalorder 2, %s22
      // Predicated region
      $region53: #{tpu_custom_call.1} parent=5 // pred_check
        %p413 = pneg %p412
      $region54: #{tpu_custom_call.1} parent=5 // pred_check_branch
        %415 = sbr.rel (%p413) target = $region56
      $region55: #{tpu_custom_call.1} parent=5 // pred_region
        %s416 = ssub.s32 %s22, 2
        // Predicated region
        $region57: #{tpu_custom_call.1} parent=55 // pred_check
          %p417 = pneg %p135
        $region58: #{tpu_custom_call.1} parent=55 // pred_check_branch
          %419 = sbr.rel (%p417) target = $region60
        $region59: #{tpu_custom_call.1} parent=55 // pred_region
          %s420 = sand.u32 %s120, 1
          %s421 = scalar_lea.sflag [#allocation4], %s420
          %s422 = sand.u32 %s120, 1
          %s423 = smul.addr %s422, 4
          %s424 = scalar_lea.vmem [#allocation7], %s423
          %426 = dma.done %s421, 64
        $region60: #{tpu_custom_call.1} parent=55 // pred_fallthru
          _
        // Predicated region
        $region61: #{tpu_custom_call.1} parent=55 // pred_check
          %p427 = pneg %p163
        $region62: #{tpu_custom_call.1} parent=55 // pred_check_branch
          %429 = sbr.rel (%p427) target = $region64
        $region63: #{tpu_custom_call.1} parent=55 // pred_region
          %s430 = sand.u32 %s28, 1
          %s431 = scalar_lea.sflag [#allocation9], %s430
          %s432 = sand.u32 %s148, 1
          %s433 = smul.addr %s432, 4
          %s434 = scalar_lea.vmem [#allocation8], %s433
          %436 = dma.done %s431, 64
        $region64: #{tpu_custom_call.1} parent=55 // pred_fallthru
          _
        // Predicated region
        $region65: #{tpu_custom_call.1} parent=55 // pred_check
          %p437 = pneg %p191
        $region66: #{tpu_custom_call.1} parent=55 // pred_check_branch
          %439 = sbr.rel (%p437) target = $region68
        $region67: #{tpu_custom_call.1} parent=55 // pred_region
          %s440 = sand.u32 %s28, 1
          %s441 = scalar_lea.sflag [#allocation9], %s440
          %s442 = sand.u32 %s176, 1
          %s443 = smul.addr %s442, 4
          %s444 = scalar_lea.vmem [#allocation10], %s443
          %446 = dma.done %s441, 64
        $region68: #{tpu_custom_call.1} parent=55 // pred_fallthru
          _
      $region56: #{tpu_custom_call.1} parent=5 // pred_fallthru
        _
    $region6: #{tpu_custom_call.1} parent=1 // loop_footer
      %s26 = sadd.s32 1, %s22
    $region7: #{tpu_custom_call.1} parent=1 // loop_footer_branch
      %21 = sbr.rel target = $region3
    $region8: #{tpu_custom_call.1} parent=1 // loop_exit
      _
    %447 = vsyncpa [#allocation3], 1
    %s448 = scalar_lea.sflag [#allocation3], 1
    %449 = vsyncpa %s448, 1
    %450 = vsyncpa [#allocation6], 1
    %451 = vsyncpa [#allocation4], 1
    %s452 = scalar_lea.sflag [#allocation4], 1
    %453 = vsyncpa %s452, 1
    %454 = vsyncpa [#allocation9], 1
    %s455 = scalar_lea.sflag [#allocation9], 1
    %456 = vsyncpa %s455, 1

</llo_original>
